<compile_context>
chip_gen: v6e
topology: v6e:2x2x1
jax: 0.10.0
libtpu: 0.0.40
codegen_flags: <defaults>
</compile_context>

<pallas_src>
import jax
import jax.numpy as jnp
from jax.experimental import pallas as pl
from jax.experimental.pallas import tpu as pltpu

_MAX_LANE = 2048        # widest lane-dense slab we try (multiple of 128)
_MIN_GRID_STEPS = 8     # aim for >= 8 grid steps (pipelining + megacore)


def _ptmodule_kernel(x_ref, o_ref):
    x = x_ref[...]
    # x + 2*x - 3/1.5 + sqrt(x)  ==  3*x - 2 + sqrt(x)
    o_ref[...] = (3.0 * x - 2.0 + jnp.sqrt(x)).astype(o_ref.dtype)


def _chip_plan():
    """Return (tile_budget_bytes, vmem_limit_bytes or None) per TPU generation."""
    kind = ""
    try:
        kind = jax.devices()[0].device_kind.lower()
    except Exception:
        pass
    if "v7" in kind:
        # v7x: 3.2 TB/s HBM -> bigger tiles amortize per-step overhead.
        # 64 MiB physical VMEM, so size the explicit limit conservatively.
        return 4 << 20, 40 << 20
    if "v6" in kind:
        # v6e: 128 MiB physical VMEM; raise the scoped limit above the 32 MiB default.
        return 4 << 20, 48 << 20
    # v5e / older / unknown: 2 MiB tiles (4 double-buffered buffers = 8 MiB)
    # stay well inside the 16 MiB default scoped-VMEM budget.
    return 2 << 20, None


def _choose_lane(n, sublane, max_lane=_MAX_LANE):
    """Widest lane width (multiple of 128, <= max_lane) dividing n, preferring
    a width whose row count n // lane is a multiple of the sublane minimum."""
    widest = 0
    for cand in range(max_lane, 0, -128):
        if n % cand != 0:
            continue
        if widest == 0:
            widest = cand
        if (n // cand) % sublane == 0:
            return cand            # widest sublane-aligned factorization
    return widest                  # widest unaligned (0 if n % 128 != 0)


def _choose_block_rows(rows, lane, itemsize, sublane, tile_bytes,
                       min_steps=_MIN_GRID_STEPS):
    """Pick block_rows: multiple of the sublane minimum, within the per-tile
    VMEM budget, and small enough that the grid has ~min_steps steps."""
    if rows <= sublane:
        return rows                                     # tiny tensor: one full-extent block
    budget = max(sublane, (tile_bytes // (lane * itemsize)) // sublane * sublane)
    want = pl.cdiv(rows, min_steps)                     # rows/block for ~min_steps steps
    want = pl.cdiv(want, sublane) * sublane             # round up to sublane multiple
    return max(sublane, min(budget, want))


def _run_elementwise(slab, block_rows, vmem_limit_bytes):
    rows, lane = slab.shape
    n = rows * lane
    itemsize = jnp.dtype(slab.dtype).itemsize
    grid = (pl.cdiv(rows, block_rows),)                 # partial final block is masked

    cp_kwargs = dict(dimension_semantics=("parallel",))
    if vmem_limit_bytes is not None:
        cp_kwargs["vmem_limit_bytes"] = int(vmem_limit_bytes)

    return pl.pallas_call(
        _ptmodule_kernel,
        out_shape=jax.ShapeDtypeStruct((rows, lane), slab.dtype),
        grid_spec=pltpu.PrefetchScalarGridSpec(
            num_scalar_prefetch=0,
            grid=grid,
            in_specs=[pl.BlockSpec((block_rows, lane), lambda i: (i, 0))],
            out_specs=pl.BlockSpec((block_rows, lane), lambda i: (i, 0)),
        ),
        compiler_params=pltpu.CompilerParams(**cp_kwargs),
        cost_estimate=pl.CostEstimate(
            flops=3 * n, transcendentals=n, bytes_accessed=2 * n * itemsize),
    )(slab)


def ptmodule_forward(x):
    """Apply y = x + 2*x - 3/1.5 + sqrt(x) elementwise via a Pallas TPU kernel."""
    if not jnp.issubdtype(x.dtype, jnp.floating):
        x = x.astype(jnp.float32)      # torch promotes to float for sqrt
    orig_shape = x.shape
    dtype = x.dtype
    n = x.size
    if n == 0:
        return x
    itemsize = jnp.dtype(dtype).itemsize
    sublane = max(8, 32 // itemsize)   # f32: 8, bf16: 16, int8/fp8: 32
    tile_bytes, vmem_limit = _chip_plan()

    lane = _choose_lane(n, sublane)
    if lane:
        # Fast path: pad-free lane-dense slab, multi-step pipelined grid.
        rows = n // lane
        block_rows = _choose_block_rows(rows, lane, itemsize, sublane, tile_bytes)
        out = _run_elementwise(x.reshape(rows, lane), block_rows, vmem_limit)
        return out.reshape(orig_shape)

    # Ragged fallback (n % 128 != 0): kernel handles the 128-aligned bulk,
    # the < 128-element tail is finished in plain jnp (negligible work),
    # avoiding the old full-tensor pad + slice HBM round trips.
    flat = x.reshape(-1)
    bulk_n = (n // 128) * 128
    tail = flat[bulk_n:]
    tail_out = (3.0 * tail - 2.0 + jnp.sqrt(tail)).astype(dtype)
    if bulk_n == 0:
        return tail_out.reshape(orig_shape)
    lane = _choose_lane(bulk_n, sublane)
    rows = bulk_n // lane
    block_rows = _choose_block_rows(rows, lane, itemsize, sublane, tile_bytes)
    bulk_out = _run_elementwise(flat[:bulk_n].reshape(rows, lane),
                                block_rows, vmem_limit)
    return jnp.concatenate([bulk_out.reshape(-1), tail_out]).reshape(orig_shape)


if __name__ == "__main__":
    key = jax.random.PRNGKey(0)
    # NCHW input, kept non-negative so sqrt matches torch semantics (no NaN).
    x = jax.random.uniform(
        key, (2, 4, 16, 16), dtype=jnp.float32, minval=0.0, maxval=4.0
    )

    y = ptmodule_forward(x)
    y = jax.block_until_ready(y)

    # reference check in plain JAX
    y_ref = x + 2.0 * x - 3.0 / 1.5 + jnp.sqrt(x)
    assert y.shape == x.shape and y.dtype == x.dtype
    assert jnp.allclose(y, y_ref, rtol=1e-6, atol=1e-6)

    print("KERNEL_OK")
</pallas_src>

<mosaic_0001>
module attributes {stable_mosaic.version = 11 : i64} {
  func.func @_ptmodule_kernel(%arg0: i32, %arg1: memref<8x256xf32, #tpu.memory_space<vmem>>, %arg2: memref<8x256xf32, #tpu.memory_space<vmem>>) attributes {dimension_semantics = [#tpu.dimension_semantics<parallel>], iteration_bounds = array<i64: 1>, scalar_prefetch = 0 : i64, scratch_operands = 0 : i64, tpu.core_type = #tpu.core_type<tc>, window_params = [{transform_indices = @transform_0, window_bounds = array<i64: 8, 256>}, {transform_indices = @transform_1, window_bounds = array<i64: 8, 256>}]} {
    %c0 = arith.constant 0 : index
    %c0_0 = arith.constant 0 : index
    %0 = vector.load %arg1[%c0, %c0_0] : memref<8x256xf32, #tpu.memory_space<vmem>>, vector<8x256xf32>
    %cst = arith.constant 3.000000e+00 : f32
    %1 = vector.broadcast %cst : f32 to vector<8x256xf32>
    %2 = arith.mulf %1, %0 : vector<8x256xf32>
    %cst_1 = arith.constant 2.000000e+00 : f32
    %3 = vector.broadcast %cst_1 : f32 to vector<8x256xf32>
    %4 = arith.subf %2, %3 : vector<8x256xf32>
    %5 = math.sqrt %0 : vector<8x256xf32>
    %6 = arith.addf %4, %5 : vector<8x256xf32>
    %c0_2 = arith.constant 0 : index
    %c0_3 = arith.constant 0 : index
    %7 = vector.load %arg2[%c0_2, %c0_3] : memref<8x256xf32, #tpu.memory_space<vmem>>, vector<8x256xf32>
    tpu.vector_store %arg2[%c0_2, %c0_3], %6 {strides = array<i32>} : memref<8x256xf32, #tpu.memory_space<vmem>>, vector<8x256xf32>,
    return
  }
  func.func @transform_0(%arg0: i32) -> (i32, i32) {
    %c0_i32 = arith.constant 0 : i32
    %c0_i32_0 = arith.constant 0 : i32
    return %arg0, %c0_i32 : i32, i32
  }
  func.func @transform_1(%arg0: i32) -> (i32, i32) {
    %c0_i32 = arith.constant 0 : i32
    %c0_i32_0 = arith.constant 0 : i32
    return %arg0, %c0_i32 : i32, i32
  }
}

</mosaic_0001>

<llo_original>
// kernel: tpu_custom_call.1
$region0: #{tpu_custom_call.1}
  #allocation0 [shape = 'u32[]', space=smem, size = 0x4, offset = 0x4, fixed_abs, tag = 'smem constant byte address 0x4 - core index']
  #allocation1 [shape = 'u32[144,128]{1,0:T(1,128)}', space=vmem, size = 0x12000, scoped, tag = 'internal scratch']
  %s0 = inlined_call_operand.hbm [shape: f32[8,256], index: 0, kind: input, shape index: {}]
  %s1 = inlined_call_operand.hbm [shape: f32[8,256], index: 1, kind: output, shape index: {}]
  %s2 = sld [smem:[#allocation0]]
  $region18: #{tpu_custom_call.1} parent=0
    _
  %s4 = ssub.s32 1, %s2
  %s5 = scalar_select 0, %s4, %s2
  $region1: #{tpu_custom_call.1} parent=0
    #allocation2 [shape = 'u8[8192]{0}', space=vmem, size = 0x2000, scoped, tag = 'input window, operand 0, single buffered']
    #allocation3 [shape = 's32[1]{0}', space=sflag, size = 0x4, scoped, tag = 'scoped memory for tpu_custom_call.1']
    #allocation4 [shape = 's32[1]{0}', space=sflag, size = 0x4, scoped, tag = 'scoped memory for tpu_custom_call.1']
    #allocation5 [shape = 'u8[8192]{0}', space=vmem, size = 0x2000, scoped, tag = 'output window, operand 0, single buffered']
    %6 = vsyncpa [#allocation3], 0
    %7 = vsyncpa [#allocation4], 0
    // Predicated region
    $region2: #{tpu_custom_call.1} parent=1 // pred_check
      _
    $region3: #{tpu_custom_call.1} parent=1 // pred_check_branch
      %9 = sbr.rel (0) target = $region5
    $region4: #{tpu_custom_call.1} parent=1 // pred_region
      %s11 = ssub.s32 256, 256
      %12 = vsyncadd [#allocation3], %s11
      %s14 = sshll.u32 [#allocation2], 4
      %s15 = int_to_ptr.vmem [resolvable:$true] %s14
      %17 = dma.hbm_to_vmem [thread:$0]  %s0, 256, %s15, [#allocation3]
    $region5: #{tpu_custom_call.1} parent=1 // pred_fallthru
      _
    // Predicated region
    $region6: #{tpu_custom_call.1} parent=1 // pred_check
      _
    $region7: #{tpu_custom_call.1} parent=1 // pred_check_branch
      %19 = sbr.rel (0) target = $region9
    $region8: #{tpu_custom_call.1} parent=1 // pred_region
      %20 = dma.done [#allocation3], 256
    $region9: #{tpu_custom_call.1} parent=1 // pred_fallthru
      _
    %v21 = vld [vmem:[#allocation2] sm:$0xff]
    %v22 = vld [vmem:[#allocation2 + $0x8] sm:$0xff]
    %v23 = vmul.f32 %v21, 3.0
    %v24 = vmul.f32 %v22, 3.0
    %v25 = vsub.f32 %v23, 2.0
    %v26 = vsub.f32 %v24, 2.0
    %v27 = vrsqrt.pop %v21
    %v28 = vmul.f32 %v21, %v27
    %vm29 = vcmp.eq.f32.partialorder %v21, inf
    %v30 = vsel %vm29, %v21, %v28
    %vm31 = vcmp.eq.f32.partialorder %v21, 0.0
    %v32 = vand.u32 %v21, 2147483648
    %v33 = vsel %vm31, %v32, %v30
    %v34 = vrsqrt.pop %v22
    %v35 = vmul.f32 %v22, %v34
    %vm36 = vcmp.eq.f32.partialorder %v22, inf
    %v37 = vsel %vm36, %v22, %v35
    %vm38 = vcmp.eq.f32.partialorder %v22, 0.0
    %v39 = vand.u32 %v22, 2147483648
    %v40 = vsel %vm38, %v39, %v37
    %v41 = vadd.f32 %v25, %v33
    %v42 = vadd.f32 %v26, %v40
    %43 = vst [vmem:[#allocation5] sm:$0xff] %v41
    %44 = vst [vmem:[#allocation5 + $0x8] sm:$0xff] %v42
    // Predicated region
    $region10: #{tpu_custom_call.1} parent=1 // pred_check
      _
    $region11: #{tpu_custom_call.1} parent=1 // pred_check_branch
      %46 = sbr.rel (0) target = $region13
    $region12: #{tpu_custom_call.1} parent=1 // pred_region
      %s48 = ssub.s32 256, 256
      %49 = vsyncadd [#allocation4], %s48
      %s51 = sshll.u32 [#allocation5], 4
      %s52 = int_to_ptr.vmem [resolvable:$true] %s51
      %54 = dma.vmem_to_hbm [thread:$0]  %s52, 256, %s1, [#allocation4]
    $region13: #{tpu_custom_call.1} parent=1 // pred_fallthru
      _
    // Predicated region
    $region14: #{tpu_custom_call.1} parent=1 // pred_check
      _
    $region15: #{tpu_custom_call.1} parent=1 // pred_check_branch
      %56 = sbr.rel (0) target = $region17
    $region16: #{tpu_custom_call.1} parent=1 // pred_region
      %57 = dma.done [#allocation4], 256
    $region17: #{tpu_custom_call.1} parent=1 // pred_fallthru
      _
    %58 = vsyncpa [#allocation3], 1
    %59 = vsyncpa [#allocation4], 1

</llo_original>
